<compile_context>
chip_gen: v5e
topology: v5e:2x2
jax: 0.10.0
libtpu: 0.0.40
codegen_flags: <defaults>
</compile_context>

<pallas_src>
from itertools import permutations

import jax
import jax.numpy as jnp
from jax import lax
from jax.experimental import pallas as pl
from jax.experimental.pallas import tpu as pltpu

EPS = 1e-16
_LANE = 128


def _cdiv(a, b):
    return -(-a // b)


def _round_up(x, m):
    return _cdiv(x, m) * m


def _sisnr_kernel(est_ref, src_ref, len_ref, out_ref,
                  d_acc, src_sum_acc, src_fullsum_acc, src_sq_acc,
                  est_sum_acc, est_sq_acc):
    """Streaming SI-SNR matrix for a (B_TILE, C, T_TILE) slab.

    est_ref : VMEM [BT, C, TT]   estimate_source tile
    src_ref : VMEM [BT, C, TT]   source tile
    len_ref : VMEM [BT, 1, 1]    int32 sequence lengths
    out_ref : VMEM [BT, C, C]    pair_wise_si_snr[i=est, j=target]
    scratch : raw masked moments accumulated across the T grid axis
    """
    kt = pl.program_id(1)
    n_kt = pl.num_programs(1)
    BT, C, TT = src_ref.shape

    @pl.when(kt == 0)
    def _init():
        d_acc[...] = jnp.zeros_like(d_acc)
        src_sum_acc[...] = jnp.zeros_like(src_sum_acc)
        src_fullsum_acc[...] = jnp.zeros_like(src_fullsum_acc)
        src_sq_acc[...] = jnp.zeros_like(src_sq_acc)
        est_sum_acc[...] = jnp.zeros_like(est_sum_acc)
        est_sq_acc[...] = jnp.zeros_like(est_sq_acc)

    lens = len_ref[...]                                          # (BT,1,1) int32
    t_idx = kt * TT + lax.broadcasted_iota(jnp.int32, (BT, 1, TT), 2)
    mask = (t_idx < lens).astype(jnp.float32)                    # (BT,1,TT)
    ones = jnp.ones_like(mask)

    src_raw = src_ref[...].astype(jnp.float32)                   # unmasked source
    est_m = est_ref[...].astype(jnp.float32) * mask              # masked estimate

    # Estimate-side (sublane-varying) stats: keepdims lane reductions -> (BT,C,1)
    est_sum_acc[...] += jnp.sum(est_m, axis=2, keepdims=True)
    est_sq_acc[...] += jnp.sum(est_m * est_m, axis=2, keepdims=True)

    # Pairwise dot + target-side (lane-varying) stats through the MXU,
    # contracting the lane-dense T axis of both operands (no zt.T is formed).
    d_acc[...] += jnp.einsum('bit,bjt->bij', est_m, src_raw,
                             preferred_element_type=jnp.float32)      # (BT,C,C)
    src_sum_acc[...] += jnp.einsum('bot,bjt->boj', mask, src_raw,
                                   preferred_element_type=jnp.float32)  # (BT,1,C)
    src_fullsum_acc[...] += jnp.einsum('bot,bjt->boj', ones, src_raw,
                                       preferred_element_type=jnp.float32)
    src_sq_acc[...] += jnp.einsum('bot,bjt->boj', mask, src_raw * src_raw,
                                  preferred_element_type=jnp.float32)   # (BT,1,C)

    @pl.when(kt == n_kt - 1)
    def _finalize():
        n = jnp.maximum(lens.astype(jnp.float32), 1.0)  # (BT,1,1); guard len==0
        D = d_acc[...]             # sum_{t<len} est_i * src_j
        Sm = src_sum_acc[...]      # sum_{t<len} src_j
        Sf = src_fullsum_acc[...]  # sum_t src_j (mean_target uses the UNMASKED
                                   #              sum, matching the torch code)
        Es = src_sq_acc[...]       # sum_{t<len} src_j^2
        Se = est_sum_acc[...]      # sum_{t<len} est_i
        Ee = est_sq_acc[...]       # sum_{t<len} est_i^2

        # Zero-mean corrections (closed form of the [C,C,T] broadcast); clamp
        # at 0 to guard against fp cancellation.
        tgt_sq = jnp.maximum(Es - (2.0 * Sf * Sm - Sf * Sf) / n, 0.0)   # (BT,1,C)
        est_sq = jnp.maximum(Ee - Se * Se / n, 0.0)                     # (BT,C,1)
        dot = D - Se * Sm / n                                           # (BT,C,C)

        energy = tgt_sq + EPS                       # s_target_energy
        dot2 = dot * dot
        proj_sq = dot2 * tgt_sq / (energy * energy)                     # (BT,C,C)
        noise_sq = jnp.maximum(est_sq - 2.0 * dot2 / energy + proj_sq, 0.0)
        out_ref[...] = 10.0 * jnp.log10(proj_sq / (noise_sq + EPS) + EPS)


def _auto_tiles(B, C, T, itemsize):
    """Pick (b_tile, t_tile): lane-dense T tiles, B rows batched per step,
    keeping 2 inputs x 2 pipeline buffers well under the smallest default
    scoped VMEM (v5e: 16 MiB; also leaves headroom on v7x's 64 MiB)."""
    t_cap = 4096
    n_t = _cdiv(T, t_cap)
    t_tile = _round_up(_cdiv(T, n_t), _LANE)

    budget = 8 * 1024 * 1024
    per_b = 2 * 2 * C * t_tile * itemsize          # 2 inputs x 2 buffers per row
    b_tile = int(max(1, min(64, budget // max(per_b, 1), B)))
    return b_tile, t_tile


def sisnr_pairwise(estimate_source, source, source_lengths,
                   *, b_tile=None, t_tile=None):
    """Returns pair_wise_si_snr: [B, C_est, C_tgt] float32."""
    B, C, T = source.shape
    itemsize = max(jnp.dtype(source.dtype).itemsize,
                   jnp.dtype(estimate_source.dtype).itemsize)
    auto_b, auto_t = _auto_tiles(B, C, T, itemsize)
    t_tile = auto_t if t_tile is None else t_tile
    b_tile = min(B, auto_b if b_tile is None else b_tile)

    n_t = _cdiv(T, t_tile)
    t_pad = t_tile * n_t
    b_pad = _round_up(B, b_tile)
    n_b = b_pad // b_tile

    lens = source_lengths.astype(jnp.int32).reshape(B, 1, 1)
    if b_pad != B:
        pad_b = b_pad - B
        lens = jnp.pad(lens, ((0, pad_b), (0, 0), (0, 0)), constant_values=1)
        source = jnp.pad(source, ((0, pad_b), (0, 0), (0, 0)))
        estimate_source = jnp.pad(estimate_source, ((0, pad_b), (0, 0), (0, 0)))
    if t_pad != T:
        pad_t = t_pad - T
        source = jnp.pad(source, ((0, 0), (0, 0), (0, pad_t)))
        estimate_source = jnp.pad(estimate_source, ((0, 0), (0, 0), (0, pad_t)))

    out = pl.pallas_call(
        _sisnr_kernel,
        out_shape=jax.ShapeDtypeStruct((b_pad, C, C), jnp.float32),
        grid_spec=pltpu.PrefetchScalarGridSpec(
            num_scalar_prefetch=0,
            grid=(n_b, n_t),
            in_specs=[
                pl.BlockSpec((b_tile, C, t_tile), lambda b, t: (b, 0, t)),
                pl.BlockSpec((b_tile, C, t_tile), lambda b, t: (b, 0, t)),
                pl.BlockSpec((b_tile, 1, 1), lambda b, t: (b, 0, 0)),
            ],
            out_specs=pl.BlockSpec((b_tile, C, C), lambda b, t: (b, 0, 0)),
            scratch_shapes=[
                pltpu.VMEM((b_tile, C, C), jnp.float32),   # d_acc
                pltpu.VMEM((b_tile, 1, C), jnp.float32),   # src_sum_acc
                pltpu.VMEM((b_tile, 1, C), jnp.float32),   # src_fullsum_acc
                pltpu.VMEM((b_tile, 1, C), jnp.float32),   # src_sq_acc
                pltpu.VMEM((b_tile, C, 1), jnp.float32),   # est_sum_acc
                pltpu.VMEM((b_tile, C, 1), jnp.float32),   # est_sq_acc
            ],
        ),
        compiler_params=pltpu.CompilerParams(
            dimension_semantics=("parallel", "arbitrary"),
            vmem_limit_bytes=32 * 1024 * 1024,
        ),
    )(estimate_source, source, lens)
    return out[:B]


def sisnr_loss(estimate_source, source, source_lengths, **tile_kwargs):
    """Matches SISNRLoss.forward: scalar loss = 20 - mean(max-perm SI-SNR / C)."""
    B, C, T = source.shape
    si_snr = sisnr_pairwise(estimate_source, source, source_lengths,
                            **tile_kwargs)                         # [B, C, C]

    # Permutation-invariant epilogue (tiny; plain JAX glue).
    perms = jnp.array(list(permutations(range(C))), dtype=jnp.int32)   # [P, C]
    perms_one_hot = jax.nn.one_hot(perms, C, dtype=si_snr.dtype)       # [P, C, C]
    snr_set = jnp.einsum('bij,pij->bp', si_snr, perms_one_hot)         # [B, P]
    max_snr = jnp.max(snr_set, axis=1, keepdims=True) / C              # [B, 1]
    return 20.0 - jnp.mean(max_snr)


def _sisnr_loss_ref(estimate_source, source, source_lengths):
    """Pure-JAX reference mirroring the PyTorch code (for a sanity check)."""
    B, C, T = source.shape
    t_idx = jnp.arange(T)[None, None, :]
    mask = (t_idx < source_lengths[:, None, None]).astype(jnp.float32)  # [B,1,T]
    est = estimate_source.astype(jnp.float32) * mask
    src = source.astype(jnp.float32)
    n = source_lengths.reshape(-1, 1, 1).astype(jnp.float32)
    mean_t = jnp.sum(src, axis=2, keepdims=True) / n
    mean_e = jnp.sum(est, axis=2, keepdims=True) / n
    zt = (src - mean_t) * mask
    ze = (est - mean_e) * mask
    s_t = zt[:, None, :, :]       # [B,1,C,T]
    s_e = ze[:, :, None, :]       # [B,C,1,T]
    dot = jnp.sum(s_e * s_t, axis=3, keepdims=True)
    energy = jnp.sum(s_t ** 2, axis=3, keepdims=True) + EPS
    proj = dot * s_t / energy
    e_noise = s_e - proj
    si = jnp.sum(proj ** 2, axis=3) / (jnp.sum(e_noise ** 2, axis=3) + EPS)
    si = 10 * jnp.log10(si + EPS)
    perms = jnp.array(list(permutations(range(C))), dtype=jnp.int32)
    oh = jax.nn.one_hot(perms, C, dtype=si.dtype)
    snr_set = jnp.einsum('bij,pij->bp', si, oh)
    max_snr = jnp.max(snr_set, axis=1, keepdims=True) / C
    return 20.0 - jnp.mean(max_snr)


if __name__ == "__main__":
    key = jax.random.PRNGKey(0)

    # Case 1: canonical small shape, whole T in a single lane-dense tile.
    B, C, T = 2, 3, 256
    k1, k2, key = jax.random.split(key, 3)
    source = jax.random.normal(k1, (B, C, T), dtype=jnp.float32)
    estimate = source + 0.3 * jax.random.normal(k2, (B, C, T), dtype=jnp.float32)
    lengths = jnp.array([T, 200], dtype=jnp.int32)

    loss = jax.block_until_ready(sisnr_loss(estimate, source, lengths))
    ref = jax.block_until_ready(_sisnr_loss_ref(estimate, source, lengths))
    assert jnp.allclose(loss, ref, rtol=1e-3, atol=1e-3), (loss, ref)

    # Case 2: exercises the streaming T-reduction axis (2 T tiles) and the
    # multi-block / padded B grid axis (b_tile=2 over B=3).
    B2, C2, T2 = 3, 2, 4608
    k3, k4, _ = jax.random.split(key, 3)
    source2 = jax.random.normal(k3, (B2, C2, T2), dtype=jnp.float32)
    estimate2 = source2 + 0.3 * jax.random.normal(k4, (B2, C2, T2),
                                                  dtype=jnp.float32)
    lengths2 = jnp.array([T2, 4000, 3000], dtype=jnp.int32)

    loss2 = jax.block_until_ready(sisnr_loss(estimate2, source2, lengths2,
                                             b_tile=2))
    ref2 = jax.block_until_ready(_sisnr_loss_ref(estimate2, source2, lengths2))
    assert jnp.allclose(loss2, ref2, rtol=1e-3, atol=1e-3), (loss2, ref2)

    print("KERNEL_OK")
</pallas_src>

<mosaic_0001>
module attributes {stable_mosaic.version = 11 : i64} {
  func.func @_sisnr_kernel(%arg0: i32, %arg1: i32, %arg2: memref<2x3x256xf32, #tpu.memory_space<vmem>>, %arg3: memref<2x3x256xf32, #tpu.memory_space<vmem>>, %arg4: memref<2x1x1xi32, #tpu.memory_space<vmem>>, %arg5: memref<2x3x3xf32, #tpu.memory_space<vmem>>, %arg6: memref<2x3x3xf32, #tpu.memory_space<vmem>>, %arg7: memref<2x1x3xf32, #tpu.memory_space<vmem>>, %arg8: memref<2x1x3xf32, #tpu.memory_space<vmem>>, %arg9: memref<2x1x3xf32, #tpu.memory_space<vmem>>, %arg10: memref<2x3x1xf32, #tpu.memory_space<vmem>>, %arg11: memref<2x3x1xf32, #tpu.memory_space<vmem>>) attributes {dimension_semantics = [#tpu.dimension_semantics<parallel>, #tpu.dimension_semantics<arbitrary>], iteration_bounds = array<i64: 1, 1>, scalar_prefetch = 0 : i64, scratch_operands = 6 : i64, tpu.core_type = #tpu.core_type<tc>, window_params = [{transform_indices = @transform_0, window_bounds = array<i64: 2, 3, 256>}, {transform_indices = @transform_1, window_bounds = array<i64: 2, 3, 256>}, {transform_indices = @transform_2, window_bounds = array<i64: 2, 1, 1>}, {transform_indices = @transform_3, window_bounds = array<i64: 2, 3, 3>}]} {
    %c0_i32 = arith.constant 0 : i32
    %0 = arith.cmpi eq, %arg1, %c0_i32 : i32
    %1 = arith.extui %0 : i1 to i32
    %c0_i32_0 = arith.constant 0 : i32
    %2 = arith.cmpi ne, %1, %c0_i32_0 : i32
    scf.if %2 {
      %cst_53 = arith.constant 0.000000e+00 : f32
      %48 = vector.broadcast %cst_53 : f32 to vector<2x3x3xf32>
      %c0_54 = arith.constant 0 : index
      %c0_55 = arith.constant 0 : index
      %c0_56 = arith.constant 0 : index
      %49 = vector.load %arg6[%c0_54, %c0_55, %c0_56] : memref<2x3x3xf32, #tpu.memory_space<vmem>>, vector<2x3x3xf32>
      tpu.vector_store %arg6[%c0_54, %c0_55, %c0_56], %48 {strides = array<i32>} : memref<2x3x3xf32, #tpu.memory_space<vmem>>, vector<2x3x3xf32>,
      %cst_57 = arith.constant 0.000000e+00 : f32
      %50 = vector.broadcast %cst_57 : f32 to vector<2x1x3xf32>
      %c0_58 = arith.constant 0 : index
      %c0_59 = arith.constant 0 : index
      %c0_60 = arith.constant 0 : index
      %51 = vector.load %arg7[%c0_58, %c0_59, %c0_60] : memref<2x1x3xf32, #tpu.memory_space<vmem>>, vector<2x1x3xf32>
      tpu.vector_store %arg7[%c0_58, %c0_59, %c0_60], %50 {strides = array<i32>} : memref<2x1x3xf32, #tpu.memory_space<vmem>>, vector<2x1x3xf32>,
      %cst_61 = arith.constant 0.000000e+00 : f32
      %52 = vector.broadcast %cst_61 : f32 to vector<2x1x3xf32>
      %c0_62 = arith.constant 0 : index
      %c0_63 = arith.constant 0 : index
      %c0_64 = arith.constant 0 : index
      %53 = vector.load %arg8[%c0_62, %c0_63, %c0_64] : memref<2x1x3xf32, #tpu.memory_space<vmem>>, vector<2x1x3xf32>
      tpu.vector_store %arg8[%c0_62, %c0_63, %c0_64], %52 {strides = array<i32>} : memref<2x1x3xf32, #tpu.memory_space<vmem>>, vector<2x1x3xf32>,
      %cst_65 = arith.constant 0.000000e+00 : f32
      %54 = vector.broadcast %cst_65 : f32 to vector<2x1x3xf32>
      %c0_66 = arith.constant 0 : index
      %c0_67 = arith.constant 0 : index
      %c0_68 = arith.constant 0 : index
      %55 = vector.load %arg9[%c0_66, %c0_67, %c0_68] : memref<2x1x3xf32, #tpu.memory_space<vmem>>, vector<2x1x3xf32>
      tpu.vector_store %arg9[%c0_66, %c0_67, %c0_68], %54 {strides = array<i32>} : memref<2x1x3xf32, #tpu.memory_space<vmem>>, vector<2x1x3xf32>,
      %cst_69 = arith.constant 0.000000e+00 : f32
      %56 = vector.broadcast %cst_69 : f32 to vector<2x3x1xf32>
      %c0_70 = arith.constant 0 : index
      %c0_71 = arith.constant 0 : index
      %c0_72 = arith.constant 0 : index
      %57 = vector.load %arg10[%c0_70, %c0_71, %c0_72] : memref<2x3x1xf32, #tpu.memory_space<vmem>>, vector<2x3x1xf32>
      tpu.vector_store %arg10[%c0_70, %c0_71, %c0_72], %56 {strides = array<i32>} : memref<2x3x1xf32, #tpu.memory_space<vmem>>, vector<2x3x1xf32>,
      %cst_73 = arith.constant 0.000000e+00 : f32
      %58 = vector.broadcast %cst_73 : f32 to vector<2x3x1xf32>
      %c0_74 = arith.constant 0 : index
      %c0_75 = arith.constant 0 : index
      %c0_76 = arith.constant 0 : index
      %59 = vector.load %arg11[%c0_74, %c0_75, %c0_76] : memref<2x3x1xf32, #tpu.memory_space<vmem>>, vector<2x3x1xf32>
      tpu.vector_store %arg11[%c0_74, %c0_75, %c0_76], %58 {strides = array<i32>} : memref<2x3x1xf32, #tpu.memory_space<vmem>>, vector<2x3x1xf32>,
    } else {
    }
    %c0 = arith.constant 0 : index
    %c0_1 = arith.constant 0 : index
    %c0_2 = arith.constant 0 : index
    %3 = vector.load %arg4[%c0, %c0_1, %c0_2] : memref<2x1x1xi32, #tpu.memory_space<vmem>>, vector<2x1x1xi32>
    %c256_i32 = arith.constant 256 : i32
    %4 = arith.muli %arg1, %c256_i32 : i32
    %5 = tpu.iota {dimensions = array<i32: 2>} : vector<2x1x256xi32>
    %6 = vector.broadcast %4 : i32 to vector<2x1x256xi32>
    %7 = arith.addi %6, %5 : vector<2x1x256xi32>
    %8 = vector.broadcast %3 : vector<2x1x1xi32> to vector<2x1x256xi32>
    %9 = arith.cmpi slt, %7, %8 : vector<2x1x256xi32>
    %10 = arith.extui %9 : vector<2x1x256xi1> to vector<2x1x256xi32>
    %11 = arith.sitofp %10 : vector<2x1x256xi32> to vector<2x1x256xf32>
    %cst = arith.constant 1.000000e+00 : f32
    %12 = vector.broadcast %cst : f32 to vector<2x1x256xf32>
    %c0_3 = arith.constant 0 : index
    %c0_4 = arith.constant 0 : index
    %c0_5 = arith.constant 0 : index
    %13 = vector.load %arg3[%c0_3, %c0_4, %c0_5] : memref<2x3x256xf32, #tpu.memory_space<vmem>>, vector<2x3x256xf32>
    %c0_6 = arith.constant 0 : index
    %c0_7 = arith.constant 0 : index
    %c0_8 = arith.constant 0 : index
    %14 = vector.load %arg2[%c0_6, %c0_7, %c0_8] : memref<2x3x256xf32, #tpu.memory_space<vmem>>, vector<2x3x256xf32>
    %15 = vector.broadcast %11 : vector<2x1x256xf32> to vector<2x3x256xf32>
    %16 = arith.mulf %14, %15 : vector<2x3x256xf32>
    %c0_9 = arith.constant 0 : index
    %c0_10 = arith.constant 0 : index
    %c0_11 = arith.constant 0 : index
    %17 = vector.load %arg10[%c0_9, %c0_10, %c0_11] : memref<2x3x1xf32, #tpu.memory_space<vmem>>, vector<2x3x1xf32>
    %cst_12 = arith.constant dense<0.000000e+00> : vector<2x3xf32>
    %18 = vector.multi_reduction <add>, %16, %cst_12 [2] : vector<2x3x256xf32> to vector<2x3xf32>
    %19 = vector.shape_cast %18 : vector<2x3xf32> to vector<2x3x1xf32>
    %20 = arith.addf %17, %19 : vector<2x3x1xf32>
    %c0_13 = arith.constant 0 : index
    %c0_14 = arith.constant 0 : index
    %c0_15 = arith.constant 0 : index
    %21 = vector.load %arg10[%c0_13, %c0_14, %c0_15] : memref<2x3x1xf32, #tpu.memory_space<vmem>>, vector<2x3x1xf32>
    tpu.vector_store %arg10[%c0_13, %c0_14, %c0_15], %20 {strides = array<i32>} : memref<2x3x1xf32, #tpu.memory_space<vmem>>, vector<2x3x1xf32>,
    %c0_16 = arith.constant 0 : index
    %c0_17 = arith.constant 0 : index
    %c0_18 = arith.constant 0 : index
    %22 = vector.load %arg11[%c0_16, %c0_17, %c0_18] : memref<2x3x1xf32, #tpu.memory_space<vmem>>, vector<2x3x1xf32>
    %23 = arith.mulf %16, %16 : vector<2x3x256xf32>
    %cst_19 = arith.constant dense<0.000000e+00> : vector<2x3xf32>
    %24 = vector.multi_reduction <add>, %23, %cst_19 [2] : vector<2x3x256xf32> to vector<2x3xf32>
    %25 = vector.shape_cast %24 : vector<2x3xf32> to vector<2x3x1xf32>
    %26 = arith.addf %22, %25 : vector<2x3x1xf32>
    %c0_20 = arith.constant 0 : index
    %c0_21 = arith.constant 0 : index
    %c0_22 = arith.constant 0 : index
    %27 = vector.load %arg11[%c0_20, %c0_21, %c0_22] : memref<2x3x1xf32, #tpu.memory_space<vmem>>, vector<2x3x1xf32>
    tpu.vector_store %arg11[%c0_20, %c0_21, %c0_22], %26 {strides = array<i32>} : memref<2x3x1xf32, #tpu.memory_space<vmem>>, vector<2x3x1xf32>,
    %c0_23 = arith.constant 0 : index
    %c0_24 = arith.constant 0 : index
    %c0_25 = arith.constant 0 : index
    %28 = vector.load %arg6[%c0_23, %c0_24, %c0_25] : memref<2x3x3xf32, #tpu.memory_space<vmem>>, vector<2x3x3xf32>
    "tpu.trace_start"() <{level = 10 : i32, message = "bit,bjt->bij"}> : () -> ()
    %cst_26 = arith.constant dense<0.000000e+00> : vector<2x3x3xf32>
    %29 = tpu.matmul %16, %13, %cst_26 {dimension_numbers = #tpu.dot_dimension_numbers<[2], [2], [1], [1], [0, 0, 0, 1, 1, 1], [0], [0]>} : vector<2x3x256xf32>, vector<2x3x256xf32>, vector<2x3x3xf32> -> vector<2x3x3xf32>
    "tpu.trace_stop"() : () -> ()
    %30 = arith.addf %28, %29 : vector<2x3x3xf32>
    %c0_27 = arith.constant 0 : index
    %c0_28 = arith.constant 0 : index
    %c0_29 = arith.constant 0 : index
    %31 = vector.load %arg6[%c0_27, %c0_28, %c0_29] : memref<2x3x3xf32, #tpu.memory_space<vmem>>, vector<2x3x3xf32>
    tpu.vector_store %arg6[%c0_27, %c0_28, %c0_29], %30 {strides = array<i32>} : memref<2x3x3xf32, #tpu.memory_space<vmem>>, vector<2x3x3xf32>,
    %c0_30 = arith.constant 0 : index
    %c0_31 = arith.constant 0 : index
    %c0_32 = arith.constant 0 : index
    %32 = vector.load %arg7[%c0_30, %c0_31, %c0_32] : memref<2x1x3xf32, #tpu.memory_space<vmem>>, vector<2x1x3xf32>
    "tpu.trace_start"() <{level = 10 : i32, message = "bot,bjt->boj"}> : () -> ()
    %cst_33 = arith.constant dense<0.000000e+00> : vector<2x1x3xf32>
    %33 = tpu.matmul %11, %13, %cst_33 {dimension_numbers = #tpu.dot_dimension_numbers<[2], [2], [1], [1], [0, 0, 0, 1, 1, 1], [0], [0]>} : vector<2x1x256xf32>, vector<2x3x256xf32>, vector<2x1x3xf32> -> vector<2x1x3xf32>
    "tpu.trace_stop"() : () -> ()
    %34 = arith.addf %32, %33 : vector<2x1x3xf32>
    %c0_34 = arith.constant 0 : index
    %c0_35 = arith.constant 0 : index
    %c0_36 = arith.constant 0 : index
    %35 = vector.load %arg7[%c0_34, %c0_35, %c0_36] : memref<2x1x3xf32, #tpu.memory_space<vmem>>, vector<2x1x3xf32>
    tpu.vector_store %arg7[%c0_34, %c0_35, %c0_36], %34 {strides = array<i32>} : memref<2x1x3xf32, #tpu.memory_space<vmem>>, vector<2x1x3xf32>,
    %c0_37 = arith.constant 0 : index
    %c0_38 = arith.constant 0 : index
    %c0_39 = arith.constant 0 : index
    %36 = vector.load %arg8[%c0_37, %c0_38, %c0_39] : memref<2x1x3xf32, #tpu.memory_space<vmem>>, vector<2x1x3xf32>
    "tpu.trace_start"() <{level = 10 : i32, message = "bot,bjt->boj"}> : () -> ()
    %cst_40 = arith.constant dense<0.000000e+00> : vector<2x1x3xf32>
    %37 = tpu.matmul %12, %13, %cst_40 {dimension_numbers = #tpu.dot_dimension_numbers<[2], [2], [1], [1], [0, 0, 0, 1, 1, 1], [0], [0]>} : vector<2x1x256xf32>, vector<2x3x256xf32>, vector<2x1x3xf32> -> vector<2x1x3xf32>
    "tpu.trace_stop"() : () -> ()
    %38 = arith.addf %36, %37 : vector<2x1x3xf32>
    %c0_41 = arith.constant 0 : index
    %c0_42 = arith.constant 0 : index
    %c0_43 = arith.constant 0 : index
    %39 = vector.load %arg8[%c0_41, %c0_42, %c0_43] : memref<2x1x3xf32, #tpu.memory_space<vmem>>, vector<2x1x3xf32>
    tpu.vector_store %arg8[%c0_41, %c0_42, %c0_43], %38 {strides = array<i32>} : memref<2x1x3xf32, #tpu.memory_space<vmem>>, vector<2x1x3xf32>,
    %c0_44 = arith.constant 0 : index
    %c0_45 = arith.constant 0 : index
    %c0_46 = arith.constant 0 : index
    %40 = vector.load %arg9[%c0_44, %c0_45, %c0_46] : memref<2x1x3xf32, #tpu.memory_space<vmem>>, vector<2x1x3xf32>
    %41 = arith.mulf %13, %13 : vector<2x3x256xf32>
    "tpu.trace_start"() <{level = 10 : i32, message = "bot,bjt->boj"}> : () -> ()
    %cst_47 = arith.constant dense<0.000000e+00> : vector<2x1x3xf32>
    %42 = tpu.matmul %11, %41, %cst_47 {dimension_numbers = #tpu.dot_dimension_numbers<[2], [2], [1], [1], [0, 0, 0, 1, 1, 1], [0], [0]>} : vector<2x1x256xf32>, vector<2x3x256xf32>, vector<2x1x3xf32> -> vector<2x1x3xf32>
    "tpu.trace_stop"() : () -> ()
    %43 = arith.addf %40, %42 : vector<2x1x3xf32>
    %c0_48 = arith.constant 0 : index
    %c0_49 = arith.constant 0 : index
    %c0_50 = arith.constant 0 : index
    %44 = vector.load %arg9[%c0_48, %c0_49, %c0_50] : memref<2x1x3xf32, #tpu.memory_space<vmem>>, vector<2x1x3xf32>
    tpu.vector_store %arg9[%c0_48, %c0_49, %c0_50], %43 {strides = array<i32>} : memref<2x1x3xf32, #tpu.memory_space<vmem>>, vector<2x1x3xf32>,
    %c0_i32_51 = arith.constant 0 : i32
    %45 = arith.cmpi eq, %arg1, %c0_i32_51 : i32
    %46 = arith.extui %45 : i1 to i32
    %c0_i32_52 = arith.constant 0 : i32
    %47 = arith.cmpi ne, %46, %c0_i32_52 : i32
    scf.if %47 {
      %48 = arith.sitofp %3 : vector<2x1x1xi32> to vector<2x1x1xf32>
      %cst_53 = arith.constant 1.000000e+00 : f32
      %49 = vector.broadcast %cst_53 : f32 to vector<2x1x1xf32>
      %50 = arith.maximumf %48, %49 : vector<2x1x1xf32>
      %c0_54 = arith.constant 0 : index
      %c0_55 = arith.constant 0 : index
      %c0_56 = arith.constant 0 : index
      %51 = vector.load %arg6[%c0_54, %c0_55, %c0_56] : memref<2x3x3xf32, #tpu.memory_space<vmem>>, vector<2x3x3xf32>
      %c0_57 = arith.constant 0 : index
      %c0_58 = arith.constant 0 : index
      %c0_59 = arith.constant 0 : index
      %52 = vector.load %arg7[%c0_57, %c0_58, %c0_59] : memref<2x1x3xf32, #tpu.memory_space<vmem>>, vector<2x1x3xf32>
      %c0_60 = arith.constant 0 : index
      %c0_61 = arith.constant 0 : index
      %c0_62 = arith.constant 0 : index
      %53 = vector.load %arg8[%c0_60, %c0_61, %c0_62] : memref<2x1x3xf32, #tpu.memory_space<vmem>>, vector<2x1x3xf32>
      %c0_63 = arith.constant 0 : index
      %c0_64 = arith.constant 0 : index
      %c0_65 = arith.constant 0 : index
      %54 = vector.load %arg9[%c0_63, %c0_64, %c0_65] : memref<2x1x3xf32, #tpu.memory_space<vmem>>, vector<2x1x3xf32>
      %c0_66 = arith.constant 0 : index
      %c0_67 = arith.constant 0 : index
      %c0_68 = arith.constant 0 : index
      %55 = vector.load %arg10[%c0_66, %c0_67, %c0_68] : memref<2x3x1xf32, #tpu.memory_space<vmem>>, vector<2x3x1xf32>
      %c0_69 = arith.constant 0 : index
      %c0_70 = arith.constant 0 : index
      %c0_71 = arith.constant 0 : index
      %56 = vector.load %arg11[%c0_69, %c0_70, %c0_71] : memref<2x3x1xf32, #tpu.memory_space<vmem>>, vector<2x3x1xf32>
      %cst_72 = arith.constant 2.000000e+00 : f32
      %57 = vector.broadcast %cst_72 : f32 to vector<2x1x3xf32>
      %58 = arith.mulf %57, %53 : vector<2x1x3xf32>
      %59 = arith.mulf %58, %52 : vector<2x1x3xf32>
      %60 = arith.mulf %53, %53 : vector<2x1x3xf32>
      %61 = arith.subf %59, %60 : vector<2x1x3xf32>
      %62 = vector.broadcast %50 : vector<2x1x1xf32> to vector<2x1x3xf32>
      %63 = arith.divf %61, %62 : vector<2x1x3xf32>
      %64 = arith.subf %54, %63 : vector<2x1x3xf32>
      %cst_73 = arith.constant 0.000000e+00 : f32
      %65 = vector.broadcast %cst_73 : f32 to vector<2x1x3xf32>
      %66 = arith.maximumf %64, %65 : vector<2x1x3xf32>
      %67 = arith.mulf %55, %55 : vector<2x3x1xf32>
      %68 = vector.broadcast %50 : vector<2x1x1xf32> to vector<2x3x1xf32>
      %69 = arith.divf %67, %68 : vector<2x3x1xf32>
      %70 = arith.subf %56, %69 : vector<2x3x1xf32>
      %cst_74 = arith.constant 0.000000e+00 : f32
      %71 = vector.broadcast %cst_74 : f32 to vector<2x3x1xf32>
      %72 = arith.maximumf %70, %71 : vector<2x3x1xf32>
      %73 = vector.broadcast %55 : vector<2x3x1xf32> to vector<2x3x3xf32>
      %74 = vector.broadcast %52 : vector<2x1x3xf32> to vector<2x3x3xf32>
      %75 = arith.mulf %73, %74 : vector<2x3x3xf32>
      %76 = vector.broadcast %50 : vector<2x1x1xf32> to vector<2x3x3xf32>
      %77 = arith.divf %75, %76 : vector<2x3x3xf32>
      %78 = arith.subf %51, %77 : vector<2x3x3xf32>
      %cst_75 = arith.constant 1.000000e-16 : f32
      %79 = vector.broadcast %cst_75 : f32 to vector<2x1x3xf32>
      %80 = arith.addf %66, %79 : vector<2x1x3xf32>
      %81 = arith.mulf %78, %78 : vector<2x3x3xf32>
      %82 = vector.broadcast %66 : vector<2x1x3xf32> to vector<2x3x3xf32>
      %83 = arith.mulf %81, %82 : vector<2x3x3xf32>
      %84 = arith.mulf %80, %80 : vector<2x1x3xf32>
      %85 = vector.broadcast %84 : vector<2x1x3xf32> to vector<2x3x3xf32>
      %86 = arith.divf %83, %85 : vector<2x3x3xf32>
      %cst_76 = arith.constant 2.000000e+00 : f32
      %87 = vector.broadcast %cst_76 : f32 to vector<2x3x3xf32>
      %88 = arith.mulf %87, %81 : vector<2x3x3xf32>
      %89 = vector.broadcast %80 : vector<2x1x3xf32> to vector<2x3x3xf32>
      %90 = arith.divf %88, %89 : vector<2x3x3xf32>
      %91 = vector.broadcast %72 : vector<2x3x1xf32> to vector<2x3x3xf32>
      %92 = arith.subf %91, %90 : vector<2x3x3xf32>
      %93 = arith.addf %92, %86 : vector<2x3x3xf32>
      %cst_77 = arith.constant 0.000000e+00 : f32
      %94 = vector.broadcast %cst_77 : f32 to vector<2x3x3xf32>
      %95 = arith.maximumf %93, %94 : vector<2x3x3xf32>
      %cst_78 = arith.constant 1.000000e-16 : f32
      %96 = vector.broadcast %cst_78 : f32 to vector<2x3x3xf32>
      %97 = arith.addf %95, %96 : vector<2x3x3xf32>
      %98 = arith.divf %86, %97 : vector<2x3x3xf32>
      %cst_79 = arith.constant 1.000000e-16 : f32
      %99 = vector.broadcast %cst_79 : f32 to vector<2x3x3xf32>
      %100 = arith.addf %98, %99 : vector<2x3x3xf32>
      %101 = math.log %100 : vector<2x3x3xf32>
      %cst_80 = arith.constant 0.434294492 : f32
      %102 = vector.broadcast %cst_80 : f32 to vector<2x3x3xf32>
      %103 = arith.mulf %101, %102 : vector<2x3x3xf32>
      %cst_81 = arith.constant 1.000000e+01 : f32
      %104 = vector.broadcast %cst_81 : f32 to vector<2x3x3xf32>
      %105 = arith.mulf %104, %103 : vector<2x3x3xf32>
      %c0_82 = arith.constant 0 : index
      %c0_83 = arith.constant 0 : index
      %c0_84 = arith.constant 0 : index
      %106 = vector.load %arg5[%c0_82, %c0_83, %c0_84] : memref<2x3x3xf32, #tpu.memory_space<vmem>>, vector<2x3x3xf32>
      tpu.vector_store %arg5[%c0_82, %c0_83, %c0_84], %105 {strides = array<i32>} : memref<2x3x3xf32, #tpu.memory_space<vmem>>, vector<2x3x3xf32>,
    } else {
    }
    return
  }
  func.func @transform_0(%arg0: i32, %arg1: i32) -> (i32, i32, i32) {
    %c0_i32 = arith.constant 0 : i32
    %c0_i32_0 = arith.constant 0 : i32
    return %arg0, %c0_i32, %arg1 : i32, i32, i32
  }
  func.func @transform_1(%arg0: i32, %arg1: i32) -> (i32, i32, i32) {
    %c0_i32 = arith.constant 0 : i32
    %c0_i32_0 = arith.constant 0 : i32
    return %arg0, %c0_i32, %arg1 : i32, i32, i32
  }
  func.func @transform_2(%arg0: i32, %arg1: i32) -> (i32, i32, i32) {
    %c0_i32 = arith.constant 0 : i32
    %c0_i32_0 = arith.constant 0 : i32
    %c0_i32_1 = arith.constant 0 : i32
    return %arg0, %c0_i32, %c0_i32_0 : i32, i32, i32
  }
  func.func @transform_3(%arg0: i32, %arg1: i32) -> (i32, i32, i32) {
    %c0_i32 = arith.constant 0 : i32
    %c0_i32_0 = arith.constant 0 : i32
    %c0_i32_1 = arith.constant 0 : i32
    return %arg0, %c0_i32, %c0_i32_0 : i32, i32, i32
  }
}

</mosaic_0001>

<llo_original>
// kernel: tpu_custom_call.1
$region0: #{tpu_custom_call.1}
  #allocation0 [shape = 'u32[]', space=smem, size = 0x4, offset = 0x4, fixed_abs, tag = 'smem constant byte address 0x4 - core index']
  #allocation1 [shape = 'u32[72,128]{1,0:T(1,128)}', space=vmem, size = 0x9000, scoped, tag = 'internal scratch']
  #allocation2 [shape = 'f32[2,3,3]{2,1,0:T(4,128)}', space=vmem, size = 0x1000, scoped, tag = 'scratch operand']
  #allocation3 [shape = 'f32[2,1,3]{2,1,0:T(1,128)}', space=vmem, size = 0x400, scoped, tag = 'scratch operand']
  #allocation4 [shape = 'f32[2,1,3]{2,1,0:T(1,128)}', space=vmem, size = 0x400, scoped, tag = 'scratch operand']
  #allocation5 [shape = 'f32[2,1,3]{2,1,0:T(1,128)}', space=vmem, size = 0x400, scoped, tag = 'scratch operand']
  #allocation6 [shape = 'f32[2,3,1]{2,1,0:T(4,128)}', space=vmem, size = 0x1000, scoped, tag = 'scratch operand']
  #allocation7 [shape = 'f32[2,3,1]{2,1,0:T(4,128)}', space=vmem, size = 0x1000, scoped, tag = 'scratch operand']
  %s0 = inlined_call_operand.vmem [shape: f32[2,3,256], index: 0, kind: input, shape index: {}]
  %s1 = inlined_call_operand.vmem [shape: f32[2,3,256], index: 1, kind: input, shape index: {}]
  %s2 = inlined_call_operand.vmem [shape: s32[2,1,1], index: 2, kind: input, shape index: {}]
  %s3 = inlined_call_operand.vmem [shape: f32[2,3,3], index: 3, kind: output, shape index: {}]
  %s4 = sld [smem:[#allocation0]]
  $region30: #{tpu_custom_call.1} parent=0
    _
  %s6 = ssub.s32 1, %s4
  %s7 = scalar_select 0, %s6, %s4
  // Predicated region
  $region2: #{tpu_custom_call.1} parent=0 // pred_check
    _
  $region3: #{tpu_custom_call.1} parent=0 // pred_check_branch
    %9 = sbr.rel (0) target = $region5
  $region4: #{tpu_custom_call.1} parent=0 // pred_region
    _
  $region5: #{tpu_custom_call.1} parent=0 // pred_fallthru
    _
  // Predicated region
  $region6: #{tpu_custom_call.1} parent=0 // pred_check
    _
  $region7: #{tpu_custom_call.1} parent=0 // pred_check_branch
    %11 = sbr.rel (0) target = $region9
  $region8: #{tpu_custom_call.1} parent=0 // pred_region
    _
  $region9: #{tpu_custom_call.1} parent=0 // pred_fallthru
    _
  // Predicated region
  $region10: #{tpu_custom_call.1} parent=0 // pred_check
    _
  $region11: #{tpu_custom_call.1} parent=0 // pred_check_branch
    %13 = sbr.rel (0) target = $region13
  $region12: #{tpu_custom_call.1} parent=0 // pred_region
    _
  $region13: #{tpu_custom_call.1} parent=0 // pred_fallthru
    _
  %p14 = scmp.eq.s32.totalorder 0, 0
  // Predicated region
  $region14: #{tpu_custom_call.1} parent=0 // pred_check
    %p15 = pneg %p14
  $region15: #{tpu_custom_call.1} parent=0 // pred_check_branch
    %17 = sbr.rel (%p15) target = $region17
  $region16: #{tpu_custom_call.1} parent=0 // pred_region
    %vm18 = vcmask 18432
    %19 = vst.msk [vmem:[#allocation2] sm:$0x7] %vm18, 0.0
    %20 = vst.msk [vmem:[#allocation2 + $0x4] sm:$0x7] %vm18, 0.0
    %vm21 = vcmask 16384
    %22 = vst.msk [vmem:[#allocation3] sm:$0x1] %vm21, 0.0
    %23 = vst.msk [vmem:[#allocation3 + $0x1] sm:$0x1] %vm21, 0.0
    %24 = vst.msk [vmem:[#allocation4] sm:$0x1] %vm21, 0.0
    %25 = vst.msk [vmem:[#allocation4 + $0x1] sm:$0x1] %vm21, 0.0
    %26 = vst.msk [vmem:[#allocation5] sm:$0x1] %vm21, 0.0
    %27 = vst.msk [vmem:[#allocation5 + $0x1] sm:$0x1] %vm21, 0.0
    %vm28 = vcmask 2048
    %29 = vst.msk [vmem:[#allocation6] sm:$0x7] %vm28, 0.0
    %30 = vst.msk [vmem:[#allocation6 + $0x4] sm:$0x7] %vm28, 0.0
    %31 = vst.msk [vmem:[#allocation7] sm:$0x7] %vm28, 0.0
    %32 = vst.msk [vmem:[#allocation7 + $0x4] sm:$0x7] %vm28, 0.0
  $region17: #{tpu_custom_call.1} parent=0 // pred_fallthru
    _
  %v33 = vld [vmem:[%s2] sm:$0x1]
  %v34 = vld [vmem:[%s2 + $0x1] sm:$0x1]
  %s35 = smul.u32 0, 256
  %v36 = vlaneseq
  %v37 = vand.u32 %v36, 127
  %v38 = vadd.s32 %v37, 128
  %v39 = vstv %s35
  %v40 = vadd.s32 %v39, %v37
  %v41 = vadd.s32 %v39, %v38
  %42 = vset.pattern.permute.xlu0 0
  %43 = vperm.xlu0 %42, %v33
  %v44 = vpop.permute.xlu0 %43
  %v45 = vperm.slane %v44, 0
  %46 = vset.pattern.permute.xlu0 0
  %47 = vperm.xlu0 %46, %v34
  %v48 = vpop.permute.xlu0 %47
  %v49 = vperm.slane %v48, 0
  %vm50 = vcmp.lt.s32.totalorder %v40, %v45
  %vm51 = vcmp.lt.s32.totalorder %v41, %v45
  %vm52 = vcmp.lt.s32.totalorder %v40, %v49
  %vm53 = vcmp.lt.s32.totalorder %v41, %v49
  %v54 = vsel %vm50, 1, 0
  %v55 = vsel %vm51, 1, 0
  %v56 = vsel %vm52, 1, 0
  %v57 = vsel %vm53, 1, 0
  %v58 = vcvt.s32.f32 %v54
  %v59 = vcvt.s32.f32 %v55
  %v60 = vcvt.s32.f32 %v56
  %v61 = vcvt.s32.f32 %v57
  %v62 = vld [vmem:[%s1] sm:$0x77]
  %v63 = vld [vmem:[%s1 + $0x8] sm:$0x77]
  %v64 = vld [vmem:[%s0] sm:$0x77]
  %v65 = vld [vmem:[%s0 + $0x8] sm:$0x77]
  %v70 = vrot.slane %v59, 4
  %v71 = vrot.slane %v61, 4
  %vm72 = vcmask 1043456
  %v73 = vsel %vm72, %v58, %v70
  %v74 = vsel %vm72, %v60, %v71
  %v77 = vmul.f32 %v64, %v73
  %v78 = vmul.f32 %v65, %v74
  %v79 = vld [vmem:[#allocation6] sm:$0x7]
  %v80 = vld [vmem:[#allocation6 + $0x4] sm:$0x7]
  %83 = vst [vmem:[#allocation1] ss:$2 sm:$0xff] %v77
  %v84 = vld.sshfl [vmem:[#allocation1] sm:$0xff pattern:$0x75316420]
  %v85 = vld.sshfl [vmem:[#allocation1 + $0x8] sm:$0xff pattern:$0x75316420]
  %s86 = scalar_lea.vmem [#allocation1], 16
  %87 = vst [vmem:[%s86] ss:$2 sm:$0xff] %v78
  %v88 = vld.sshfl [vmem:[#allocation1 + $0x10] sm:$0xff pattern:$0x75316420]
  %v89 = vld.sshfl [vmem:[#allocation1 + $0x18] sm:$0xff pattern:$0x75316420]
  %vm94 = vcmask 1042432
  %v95 = vsel %vm94, %v84, 0.0
  %v96 = vsel %vm94, %v85, 0.0
  %v97 = vadd.f32 %v95, %v96
  %98 = vadd.xlane.f32.xlu0 %v97
  %v99 = vpop.xlane.xlu0 %98
  %v100 = vsel %vm94, %v88, 0.0
  %v101 = vsel %vm94, %v89, 0.0
  %v102 = vadd.f32 %v100, %v101
  %103 = vadd.xlane.f32.xlu0 %v102
  %v104 = vpop.xlane.xlu0 %103
  %v105 = vadd.f32 %v79, %v99
  %v106 = vadd.f32 %v80, %v104
  %vm107 = vcmask 2048
  %108 = vst.msk [vmem:[#allocation6] sm:$0x7] %vm107, %v105
  %109 = vst.msk [vmem:[#allocation6 + $0x4] sm:$0x7] %vm107, %v106
  %v110 = vld [vmem:[#allocation7] sm:$0x7]
  %v111 = vld [vmem:[#allocation7 + $0x4] sm:$0x7]
  %v112 = vmul.f32 %v77, %v77
  %v113 = vmul.f32 %v78, %v78
  %116 = vst [vmem:[#allocation1] ss:$2 sm:$0xff] %v112
  %v117 = vld.sshfl [vmem:[#allocation1] sm:$0xff pattern:$0x75316420]
  %v118 = vld.sshfl [vmem:[#allocation1 + $0x8] sm:$0xff pattern:$0x75316420]
  %s119 = scalar_lea.vmem [#allocation1], 16
  %120 = vst [vmem:[%s119] ss:$2 sm:$0xff] %v113
  %v121 = vld.sshfl [vmem:[#allocation1 + $0x10] sm:$0xff pattern:$0x75316420]
  %v122 = vld.sshfl [vmem:[#allocation1 + $0x18] sm:$0xff pattern:$0x75316420]
  %v127 = vsel %vm94, %v117, 0.0
  %v128 = vsel %vm94, %v118, 0.0
  %v129 = vadd.f32 %v127, %v128
  %130 = vadd.xlane.f32.xlu0 %v129
  %v131 = vpop.xlane.xlu0 %130
  %v132 = vsel %vm94, %v121, 0.0
  %v133 = vsel %vm94, %v122, 0.0
  %v134 = vadd.f32 %v132, %v133
  %135 = vadd.xlane.f32.xlu0 %v134
  %v136 = vpop.xlane.xlu0 %135
  %v137 = vadd.f32 %v110, %v131
  %v138 = vadd.f32 %v111, %v136
  %139 = vst.msk [vmem:[#allocation7] sm:$0x7] %vm107, %v137
  %140 = vst.msk [vmem:[#allocation7 + $0x4] sm:$0x7] %vm107, %v138
  %v141 = vld [vmem:[#allocation2] sm:$0x7]
  %v142 = vld [vmem:[#allocation2 + $0x4] sm:$0x7]
  %143 = vst [vmem:[#allocation1] ss:$2 sm:$0xff] %v77
  %v144 = vld.sshfl [vmem:[#allocation1] sm:$0xff pattern:$0x75316420]
  %v145 = vld.sshfl [vmem:[#allocation1 + $0x8] sm:$0xff pattern:$0x75316420]
  %149 = vst [vmem:[#allocation1] ss:$2 sm:$0xff] %v62
  %v150 = vld.sshfl [vmem:[#allocation1] sm:$0xff pattern:$0x75316420]
  %v151 = vld.sshfl [vmem:[#allocation1 + $0x8] sm:$0xff pattern:$0x75316420]
  %154 = vmatpush.xpose.msra.mxu0 0.0
  %155 = vmatpush.xpose.msra.mxu0 0.0
  %156 = vmatpush.xpose.msra.mxu0 0.0
  %157 = vmatpush.xpose.msra.mxu0 0.0
  %158 = vmatpush.xpose.msra.mxu0 0.0
  %159 = vmatpush.xpose.msra.mxu0 0.0
  %160 = vmatpush.xpose.msra.mxu0 0.0
  %161 = vmatpush.xpose.msra.mxu0 0.0
  %162 = vmatpush.xpose.msra.mxu0 0.0
  %163 = vmatpush.xpose.msra.mxu0 0.0
  %164 = vmatpush.xpose.msra.mxu0 0.0
  %165 = vmatpush.xpose.msra.mxu0 0.0
  %166 = vmatpush.xpose.msra.mxu0 0.0
  %167 = vmatpush.xpose.msra.mxu0 0.0
  %168 = vmatpush.xpose.msra.mxu0 0.0
  %169 = vmatpush.xpose.msra.mxu0 %v150
  %170 = vmatmul.f32.gmra.mxu0 %v144
  %v171 = vpop.f32.mrf.mxu0
  %v172 = vadd.f32 0.0, %v171
  %173 = vdwg.mxu0
  %174 = vmatpush.xpose.msra.mxu0 0.0
  %175 = vmatpush.xpose.msra.mxu0 0.0
  %176 = vmatpush.xpose.msra.mxu0 0.0
  %177 = vmatpush.xpose.msra.mxu0 0.0
  %178 = vmatpush.xpose.msra.mxu0 0.0
  %179 = vmatpush.xpose.msra.mxu0 0.0
  %180 = vmatpush.xpose.msra.mxu0 0.0
  %181 = vmatpush.xpose.msra.mxu0 0.0
  %182 = vmatpush.xpose.msra.mxu0 0.0
  %183 = vmatpush.xpose.msra.mxu0 0.0
  %184 = vmatpush.xpose.msra.mxu0 0.0
  %185 = vmatpush.xpose.msra.mxu0 0.0
  %186 = vmatpush.xpose.msra.mxu0 0.0
  %187 = vmatpush.xpose.msra.mxu0 0.0
  %188 = vmatpush.xpose.msra.mxu0 0.0
  %189 = vmatpush.xpose.msra.mxu0 %v151
  %190 = vmatmul.f32.gmra.mxu0 %v145
  %v191 = vpop.f32.mrf.mxu0
  %v192 = vadd.f32 %v172, %v191
  %193 = vdwg.mxu0
  %194 = vst [vmem:[#allocation1] ss:$2 sm:$0xff] %v78
  %v195 = vld.sshfl [vmem:[#allocation1] sm:$0xff pattern:$0x75316420]
  %v196 = vld.sshfl [vmem:[#allocation1 + $0x8] sm:$0xff pattern:$0x75316420]
  %200 = vst [vmem:[#allocation1] ss:$2 sm:$0xff] %v63
  %v201 = vld.sshfl [vmem:[#allocation1] sm:$0xff pattern:$0x75316420]
  %v202 = vld.sshfl [vmem:[#allocation1 + $0x8] sm:$0xff pattern:$0x75316420]
  %205 = vmatpush.xpose.msra.mxu0 0.0
  %206 = vmatpush.xpose.msra.mxu0 0.0
  %207 = vmatpush.xpose.msra.mxu0 0.0
  %208 = vmatpush.xpose.msra.mxu0 0.0
  %209 = vmatpush.xpose.msra.mxu0 0.0
  %210 = vmatpush.xpose.msra.mxu0 0.0
  %211 = vmatpush.xpose.msra.mxu0 0.0
  %212 = vmatpush.xpose.msra.mxu0 0.0
  %213 = vmatpush.xpose.msra.mxu0 0.0
  %214 = vmatpush.xpose.msra.mxu0 0.0
  %215 = vmatpush.xpose.msra.mxu0 0.0
  %216 = vmatpush.xpose.msra.mxu0 0.0
  %217 = vmatpush.xpose.msra.mxu0 0.0
  %218 = vmatpush.xpose.msra.mxu0 0.0
  %219 = vmatpush.xpose.msra.mxu0 0.0
  %220 = vmatpush.xpose.msra.mxu0 %v201
  %221 = vmatmul.f32.gmra.mxu0 %v195
  %v222 = vpop.f32.mrf.mxu0
  %v223 = vadd.f32 0.0, %v222
  %224 = vdwg.mxu0
  %225 = vmatpush.xpose.msra.mxu0 0.0
  %226 = vmatpush.xpose.msra.mxu0 0.0
  %227 = vmatpush.xpose.msra.mxu0 0.0
  %228 = vmatpush.xpose.msra.mxu0 0.0
  %229 = vmatpush.xpose.msra.mxu0 0.0
  %230 = vmatpush.xpose.msra.mxu0 0.0
  %231 = vmatpush.xpose.msra.mxu0 0.0
  %232 = vmatpush.xpose.msra.mxu0 0.0
  %233 = vmatpush.xpose.msra.mxu0 0.0
  %234 = vmatpush.xpose.msra.mxu0 0.0
  %235 = vmatpush.xpose.msra.mxu0 0.0
  %236 = vmatpush.xpose.msra.mxu0 0.0
  %237 = vmatpush.xpose.msra.mxu0 0.0
  %238 = vmatpush.xpose.msra.mxu0 0.0
  %239 = vmatpush.xpose.msra.mxu0 0.0
  %240 = vmatpush.xpose.msra.mxu0 %v202
  %241 = vmatmul.f32.gmra.mxu0 %v196
  %v242 = vpop.f32.mrf.mxu0
  %v243 = vadd.f32 %v223, %v242
  %244 = vdwg.mxu0
  %v245 = vadd.f32 %v141, %v192
  %v246 = vadd.f32 %v142, %v243
  %vm247 = vcmask 18432
  %248 = vst.msk [vmem:[#allocation2] sm:$0x7] %vm247, %v245
  %249 = vst.msk [vmem:[#allocation2 + $0x4] sm:$0x7] %vm247, %v246
  %v250 = vld [vmem:[#allocation3] sm:$0x1]
  %v251 = vld [vmem:[#allocation3 + $0x1] sm:$0x1]
  %252 = vst [vmem:[#allocation1] ss:$2 sm:$0xff] %v62
  %v253 = vld.sshfl [vmem:[#allocation1] sm:$0xff pattern:$0x75316420]
  %v254 = vld.sshfl [vmem:[#allocation1 + $0x8] sm:$0xff pattern:$0x75316420]
  %257 = vmatpush.xpose.msra.mxu0 0.0
  %258 = vmatpush.xpose.msra.mxu0 0.0
  %259 = vmatpush.xpose.msra.mxu0 0.0
  %260 = vmatpush.xpose.msra.mxu0 0.0
  %261 = vmatpush.xpose.msra.mxu0 0.0
  %262 = vmatpush.xpose.msra.mxu0 0.0
  %263 = vmatpush.xpose.msra.mxu0 0.0
  %264 = vmatpush.xpose.msra.mxu0 0.0
  %265 = vmatpush.xpose.msra.mxu0 0.0
  %266 = vmatpush.xpose.msra.mxu0 0.0
  %267 = vmatpush.xpose.msra.mxu0 0.0
  %268 = vmatpush.xpose.msra.mxu0 0.0
  %269 = vmatpush.xpose.msra.mxu0 0.0
  %270 = vmatpush.xpose.msra.mxu0 0.0
  %271 = vmatpush.xpose.msra.mxu0 0.0
  %272 = vmatpush.xpose.msra.mxu0 %v253
  %273 = vmatmul.f32.gmra.mxu0 %v58
  %v274 = vpop.f32.mrf.mxu0
  %v275 = vadd.f32 0.0, %v274
  %276 = vdwg.mxu0
  %277 = vmatpush.xpose.msra.mxu0 0.0
  %278 = vmatpush.xpose.msra.mxu0 0.0
  %279 = vmatpush.xpose.msra.mxu0 0.0
  %280 = vmatpush.xpose.msra.mxu0 0.0
  %281 = vmatpush.xpose.msra.mxu0 0.0
  %282 = vmatpush.xpose.msra.mxu0 0.0
  %283 = vmatpush.xpose.msra.mxu0 0.0
  %284 = vmatpush.xpose.msra.mxu0 0.0
  %285 = vmatpush.xpose.msra.mxu0 0.0
  %286 = vmatpush.xpose.msra.mxu0 0.0
  %287 = vmatpush.xpose.msra.mxu0 0.0
  %288 = vmatpush.xpose.msra.mxu0 0.0
  %289 = vmatpush.xpose.msra.mxu0 0.0
  %290 = vmatpush.xpose.msra.mxu0 0.0
  %291 = vmatpush.xpose.msra.mxu0 0.0
  %292 = vmatpush.xpose.msra.mxu0 %v254
  %293 = vmatmul.f32.gmra.mxu0 %v59
  %v294 = vpop.f32.mrf.mxu0
  %v295 = vadd.f32 %v275, %v294
  %296 = vdwg.mxu0
  %297 = vst [vmem:[#allocation1] ss:$2 sm:$0xff] %v63
  %v298 = vld.sshfl [vmem:[#allocation1] sm:$0xff pattern:$0x75316420]
  %v299 = vld.sshfl [vmem:[#allocation1 + $0x8] sm:$0xff pattern:$0x75316420]
  %302 = vmatpush.xpose.msra.mxu0 0.0
  %303 = vmatpush.xpose.msra.mxu0 0.0
  %304 = vmatpush.xpose.msra.mxu0 0.0
  %305 = vmatpush.xpose.msra.mxu0 0.0
  %306 = vmatpush.xpose.msra.mxu0 0.0
  %307 = vmatpush.xpose.msra.mxu0 0.0
  %308 = vmatpush.xpose.msra.mxu0 0.0
  %309 = vmatpush.xpose.msra.mxu0 0.0
  %310 = vmatpush.xpose.msra.mxu0 0.0
  %311 = vmatpush.xpose.msra.mxu0 0.0
  %312 = vmatpush.xpose.msra.mxu0 0.0
  %313 = vmatpush.xpose.msra.mxu0 0.0
  %314 = vmatpush.xpose.msra.mxu0 0.0
  %315 = vmatpush.xpose.msra.mxu0 0.0
  %316 = vmatpush.xpose.msra.mxu0 0.0
  %317 = vmatpush.xpose.msra.mxu0 %v298
  %318 = vmatmul.f32.gmra.mxu0 %v60
  %v319 = vpop.f32.mrf.mxu0
  %v320 = vadd.f32 0.0, %v319
  %321 = vdwg.mxu0
  %322 = vmatpush.xpose.msra.mxu0 0.0
  %323 = vmatpush.xpose.msra.mxu0 0.0
  %324 = vmatpush.xpose.msra.mxu0 0.0
  %325 = vmatpush.xpose.msra.mxu0 0.0
  %326 = vmatpush.xpose.msra.mxu0 0.0
  %327 = vmatpush.xpose.msra.mxu0 0.0
  %328 = vmatpush.xpose.msra.mxu0 0.0
  %329 = vmatpush.xpose.msra.mxu0 0.0
  %330 = vmatpush.xpose.msra.mxu0 0.0
  %331 = vmatpush.xpose.msra.mxu0 0.0
  %332 = vmatpush.xpose.msra.mxu0 0.0
  %333 = vmatpush.xpose.msra.mxu0 0.0
  %334 = vmatpush.xpose.msra.mxu0 0.0
  %335 = vmatpush.xpose.msra.mxu0 0.0
  %336 = vmatpush.xpose.msra.mxu0 0.0
  %337 = vmatpush.xpose.msra.mxu0 %v299
  %338 = vmatmul.f32.gmra.mxu0 %v61
  %v339 = vpop.f32.mrf.mxu0
  %v340 = vadd.f32 %v320, %v339
  %341 = vdwg.mxu0
  %v342 = vadd.f32 %v250, %v295
  %v343 = vadd.f32 %v251, %v340
  %vm344 = vcmask 16384
  %345 = vst.msk [vmem:[#allocation3] sm:$0x1] %vm344, %v342
  %346 = vst.msk [vmem:[#allocation3 + $0x1] sm:$0x1] %vm344, %v343
  %v347 = vld [vmem:[#allocation4] sm:$0x1]
  %v348 = vld [vmem:[#allocation4 + $0x1] sm:$0x1]
  %349 = vst [vmem:[#allocation1] ss:$2 sm:$0xff] %v62
  %v350 = vld.sshfl [vmem:[#allocation1] sm:$0xff pattern:$0x75316420]
  %v351 = vld.sshfl [vmem:[#allocation1 + $0x8] sm:$0xff pattern:$0x75316420]
  %354 = vmatpush.xpose.msra.mxu0 0.0
  %355 = vmatpush.xpose.msra.mxu0 0.0
  %356 = vmatpush.xpose.msra.mxu0 0.0
  %357 = vmatpush.xpose.msra.mxu0 0.0
  %358 = vmatpush.xpose.msra.mxu0 0.0
  %359 = vmatpush.xpose.msra.mxu0 0.0
  %360 = vmatpush.xpose.msra.mxu0 0.0
  %361 = vmatpush.xpose.msra.mxu0 0.0
  %362 = vmatpush.xpose.msra.mxu0 0.0
  %363 = vmatpush.xpose.msra.mxu0 0.0
  %364 = vmatpush.xpose.msra.mxu0 0.0
  %365 = vmatpush.xpose.msra.mxu0 0.0
  %366 = vmatpush.xpose.msra.mxu0 0.0
  %367 = vmatpush.xpose.msra.mxu0 0.0
  %368 = vmatpush.xpose.msra.mxu0 0.0
  %369 = vmatpush.xpose.msra.mxu0 %v350
  %370 = vmatmul.f32.gmra.mxu0 1.0
  %v371 = vpop.f32.mrf.mxu0
  %v372 = vadd.f32 0.0, %v371
  %373 = vdwg.mxu0
  %374 = vmatpush.xpose.msra.mxu0 0.0
  %375 = vmatpush.xpose.msra.mxu0 0.0
  %376 = vmatpush.xpose.msra.mxu0 0.0
  %377 = vmatpush.xpose.msra.mxu0 0.0
  %378 = vmatpush.xpose.msra.mxu0 0.0
  %379 = vmatpush.xpose.msra.mxu0 0.0
  %380 = vmatpush.xpose.msra.mxu0 0.0
  %381 = vmatpush.xpose.msra.mxu0 0.0
  %382 = vmatpush.xpose.msra.mxu0 0.0
  %383 = vmatpush.xpose.msra.mxu0 0.0
  %384 = vmatpush.xpose.msra.mxu0 0.0
  %385 = vmatpush.xpose.msra.mxu0 0.0
  %386 = vmatpush.xpose.msra.mxu0 0.0
  %387 = vmatpush.xpose.msra.mxu0 0.0
  %388 = vmatpush.xpose.msra.mxu0 0.0
  %389 = vmatpush.xpose.msra.mxu0 %v351
  %390 = vmatmul.f32.gmra.mxu0 1.0
  %v391 = vpop.f32.mrf.mxu0
  %v392 = vadd.f32 %v372, %v391
  %393 = vdwg.mxu0
  %394 = vst [vmem:[#allocation1] ss:$2 sm:$0xff] %v63
  %v395 = vld.sshfl [vmem:[#allocation1] sm:$0xff pattern:$0x75316420]
  %v396 = vld.sshfl [vmem:[#allocation1 + $0x8] sm:$0xff pattern:$0x75316420]
  %399 = vmatpush.xpose.msra.mxu0 0.0
  %400 = vmatpush.xpose.msra.mxu0 0.0
  %401 = vmatpush.xpose.msra.mxu0 0.0
  %402 = vmatpush.xpose.msra.mxu0 0.0
  %403 = vmatpush.xpose.msra.mxu0 0.0
  %404 = vmatpush.xpose.msra.mxu0 0.0
  %405 = vmatpush.xpose.msra.mxu0 0.0
  %406 = vmatpush.xpose.msra.mxu0 0.0
  %407 = vmatpush.xpose.msra.mxu0 0.0
  %408 = vmatpush.xpose.msra.mxu0 0.0
  %409 = vmatpush.xpose.msra.mxu0 0.0
  %410 = vmatpush.xpose.msra.mxu0 0.0
  %411 = vmatpush.xpose.msra.mxu0 0.0
  %412 = vmatpush.xpose.msra.mxu0 0.0
  %413 = vmatpush.xpose.msra.mxu0 0.0
  %414 = vmatpush.xpose.msra.mxu0 %v395
  %415 = vmatmul.f32.gmra.mxu0 1.0
  %v416 = vpop.f32.mrf.mxu0
  %v417 = vadd.f32 0.0, %v416
  %418 = vdwg.mxu0
  %419 = vmatpush.xpose.msra.mxu0 0.0
  %420 = vmatpush.xpose.msra.mxu0 0.0
  %421 = vmatpush.xpose.msra.mxu0 0.0
  %422 = vmatpush.xpose.msra.mxu0 0.0
  %423 = vmatpush.xpose.msra.mxu0 0.0
  %424 = vmatpush.xpose.msra.mxu0 0.0
  %425 = vmatpush.xpose.msra.mxu0 0.0
  %426 = vmatpush.xpose.msra.mxu0 0.0
  %427 = vmatpush.xpose.msra.mxu0 0.0
  %428 = vmatpush.xpose.msra.mxu0 0.0
  %429 = vmatpush.xpose.msra.mxu0 0.0
  %430 = vmatpush.xpose.msra.mxu0 0.0
  %431 = vmatpush.xpose.msra.mxu0 0.0
  %432 = vmatpush.xpose.msra.mxu0 0.0
  %433 = vmatpush.xpose.msra.mxu0 0.0
  %434 = vmatpush.xpose.msra.mxu0 %v396
  %435 = vmatmul.f32.gmra.mxu0 1.0
  %v436 = vpop.f32.mrf.mxu0
  %v437 = vadd.f32 %v417, %v436
  %438 = vdwg.mxu0
  %v439 = vadd.f32 %v347, %v392
  %v440 = vadd.f32 %v348, %v437
  %441 = vst.msk [vmem:[#allocation4] sm:$0x1] %vm344, %v439
  %442 = vst.msk [vmem:[#allocation4 + $0x1] sm:$0x1] %vm344, %v440
  %v443 = vld [vmem:[#allocation5] sm:$0x1]
  %v444 = vld [vmem:[#allocation5 + $0x1] sm:$0x1]
  %v445 = vmul.f32 %v62, %v62
  %v446 = vmul.f32 %v63, %v63
  %448 = vst [vmem:[#allocation1] ss:$2 sm:$0xff] %v445
  %v449 = vld.sshfl [vmem:[#allocation1] sm:$0xff pattern:$0x75316420]
  %v450 = vld.sshfl [vmem:[#allocation1 + $0x8] sm:$0xff pattern:$0x75316420]
  %453 = vmatpush.xpose.msra.mxu0 0.0
  %454 = vmatpush.xpose.msra.mxu0 0.0
  %455 = vmatpush.xpose.msra.mxu0 0.0
  %456 = vmatpush.xpose.msra.mxu0 0.0
  %457 = vmatpush.xpose.msra.mxu0 0.0
  %458 = vmatpush.xpose.msra.mxu0 0.0
  %459 = vmatpush.xpose.msra.mxu0 0.0
  %460 = vmatpush.xpose.msra.mxu0 0.0
  %461 = vmatpush.xpose.msra.mxu0 0.0
  %462 = vmatpush.xpose.msra.mxu0 0.0
  %463 = vmatpush.xpose.msra.mxu0 0.0
  %464 = vmatpush.xpose.msra.mxu0 0.0
  %465 = vmatpush.xpose.msra.mxu0 0.0
  %466 = vmatpush.xpose.msra.mxu0 0.0
  %467 = vmatpush.xpose.msra.mxu0 0.0
  %468 = vmatpush.xpose.msra.mxu0 %v449
  %469 = vmatmul.f32.gmra.mxu0 %v58
  %v470 = vpop.f32.mrf.mxu0
  %v471 = vadd.f32 0.0, %v470
  %472 = vdwg.mxu0
  %473 = vmatpush.xpose.msra.mxu0 0.0
  %474 = vmatpush.xpose.msra.mxu0 0.0
  %475 = vmatpush.xpose.msra.mxu0 0.0
  %476 = vmatpush.xpose.msra.mxu0 0.0
  %477 = vmatpush.xpose.msra.mxu0 0.0
  %478 = vmatpush.xpose.msra.mxu0 0.0
  %479 = vmatpush.xpose.msra.mxu0 0.0
  %480 = vmatpush.xpose.msra.mxu0 0.0
  %481 = vmatpush.xpose.msra.mxu0 0.0
  %482 = vmatpush.xpose.msra.mxu0 0.0
  %483 = vmatpush.xpose.msra.mxu0 0.0
  %484 = vmatpush.xpose.msra.mxu0 0.0
  %485 = vmatpush.xpose.msra.mxu0 0.0
  %486 = vmatpush.xpose.msra.mxu0 0.0
  %487 = vmatpush.xpose.msra.mxu0 0.0
  %488 = vmatpush.xpose.msra.mxu0 %v450
  %489 = vmatmul.f32.gmra.mxu0 %v59
  %v490 = vpop.f32.mrf.mxu0
  %v491 = vadd.f32 %v471, %v490
  %492 = vdwg.mxu0
  %494 = vst [vmem:[#allocation1] ss:$2 sm:$0xff] %v446
  %v495 = vld.sshfl [vmem:[#allocation1] sm:$0xff pattern:$0x75316420]
  %v496 = vld.sshfl [vmem:[#allocation1 + $0x8] sm:$0xff pattern:$0x75316420]
  %499 = vmatpush.xpose.msra.mxu0 0.0
  %500 = vmatpush.xpose.msra.mxu0 0.0
  %501 = vmatpush.xpose.msra.mxu0 0.0
  %502 = vmatpush.xpose.msra.mxu0 0.0
  %503 = vmatpush.xpose.msra.mxu0 0.0
  %504 = vmatpush.xpose.msra.mxu0 0.0
  %505 = vmatpush.xpose.msra.mxu0 0.0
  %506 = vmatpush.xpose.msra.mxu0 0.0
  %507 = vmatpush.xpose.msra.mxu0 0.0
  %508 = vmatpush.xpose.msra.mxu0 0.0
  %509 = vmatpush.xpose.msra.mxu0 0.0
  %510 = vmatpush.xpose.msra.mxu0 0.0
  %511 = vmatpush.xpose.msra.mxu0 0.0
  %512 = vmatpush.xpose.msra.mxu0 0.0
  %513 = vmatpush.xpose.msra.mxu0 0.0
  %514 = vmatpush.xpose.msra.mxu0 %v495
  %515 = vmatmul.f32.gmra.mxu0 %v60
  %v516 = vpop.f32.mrf.mxu0
  %v517 = vadd.f32 0.0, %v516
  %518 = vdwg.mxu0
  %519 = vmatpush.xpose.msra.mxu0 0.0
  %520 = vmatpush.xpose.msra.mxu0 0.0
  %521 = vmatpush.xpose.msra.mxu0 0.0
  %522 = vmatpush.xpose.msra.mxu0 0.0
  %523 = vmatpush.xpose.msra.mxu0 0.0
  %524 = vmatpush.xpose.msra.mxu0 0.0
  %525 = vmatpush.xpose.msra.mxu0 0.0
  %526 = vmatpush.xpose.msra.mxu0 0.0
  %527 = vmatpush.xpose.msra.mxu0 0.0
  %528 = vmatpush.xpose.msra.mxu0 0.0
  %529 = vmatpush.xpose.msra.mxu0 0.0
  %530 = vmatpush.xpose.msra.mxu0 0.0
  %531 = vmatpush.xpose.msra.mxu0 0.0
  %532 = vmatpush.xpose.msra.mxu0 0.0
  %533 = vmatpush.xpose.msra.mxu0 0.0
  %534 = vmatpush.xpose.msra.mxu0 %v496
  %535 = vmatmul.f32.gmra.mxu0 %v61
  %v536 = vpop.f32.mrf.mxu0
  %v537 = vadd.f32 %v517, %v536
  %538 = vdwg.mxu0
  %v539 = vadd.f32 %v443, %v491
  %v540 = vadd.f32 %v444, %v537
  %541 = vst.msk [vmem:[#allocation5] sm:$0x1] %vm344, %v539
  %542 = vst.msk [vmem:[#allocation5 + $0x1] sm:$0x1] %vm344, %v540
  // Predicated region
  $region18: #{tpu_custom_call.1} parent=0 // pred_check
    %p543 = pneg %p14
  $region19: #{tpu_custom_call.1} parent=0 // pred_check_branch
    %545 = sbr.rel (%p543) target = $region21
  $region20: #{tpu_custom_call.1} parent=0 // pred_region
    %v546 = vcvt.s32.f32 %v33
    %v547 = vcvt.s32.f32 %v34
    %v548 = vmax.f32 %v546, 1.0
    %v549 = vmax.f32 %v547, 1.0
    %v550 = vld [vmem:[#allocation2] sm:$0x7]
    %v551 = vld [vmem:[#allocation2 + $0x4] sm:$0x7]
    %v552 = vld [vmem:[#allocation3] sm:$0x1]
    %v553 = vld [vmem:[#allocation3 + $0x1] sm:$0x1]
    %v554 = vld [vmem:[#allocation4] sm:$0x1]
    %v555 = vld [vmem:[#allocation4 + $0x1] sm:$0x1]
    %v556 = vld [vmem:[#allocation5] sm:$0x1]
    %v557 = vld [vmem:[#allocation5 + $0x1] sm:$0x1]
    %v558 = vld [vmem:[#allocation6] sm:$0x7]
    %v559 = vld [vmem:[#allocation6 + $0x4] sm:$0x7]
    %v560 = vld [vmem:[#allocation7] sm:$0x7]
    %v561 = vld [vmem:[#allocation7 + $0x4] sm:$0x7]
    %v562 = vmul.f32 %v554, 2.0
    %v563 = vmul.f32 %v555, 2.0
    %v564 = vmul.f32 %v562, %v552
    %v565 = vmul.f32 %v563, %v553
    %v566 = vmul.f32 %v554, %v554
    %v567 = vmul.f32 %v555, %v555
    %v568 = vsub.f32 %v564, %v566
    %v569 = vsub.f32 %v565, %v567
    %571 = vset.pattern.permute.xlu0 0
    %572 = vperm.xlu0 %571, %v548
    %v573 = vpop.permute.xlu0 %572
    %v575 = vperm.slane %v573, 0
    %577 = vset.pattern.permute.xlu0 0
    %578 = vperm.xlu0 %577, %v549
    %v579 = vpop.permute.xlu0 %578
    %v581 = vperm.slane %v579, 0
    %v582 = vrcp.pop %v575
    %v583 = vmul.f32 %v575, %v582
    %v584 = vsub.f32 1.0, %v583
    %v585 = vmul.f32 %v582, %v584
    %v586 = vadd.f32 %v582, %v585
    %vm587 = vweird.f32 %v575
    %vm588 = vweird.f32 %v582
    %vm589 = vmor %vm587, %vm588
    %v590 = vsel %vm589, %v582, %v586
    %v591 = vand.u32 2147483647, %v575
    %vm592 = vcmp.eq.f32.partialorder %v591, 8.507059e+37
    %v593 = vand.u32 %v575, 2147483648
    %v594 = vor.u32 1.1754944e-38, %v593
    %v595 = vsel %vm592, %v594, %v590
    %v596 = vmul.f32 %v568, %v595
    %v597 = vrcp.pop %v581
    %v598 = vmul.f32 %v581, %v597
    %v599 = vsub.f32 1.0, %v598
    %v600 = vmul.f32 %v597, %v599
    %v601 = vadd.f32 %v597, %v600
    %vm602 = vweird.f32 %v581
    %vm603 = vweird.f32 %v597
    %vm604 = vmor %vm602, %vm603
    %v605 = vsel %vm604, %v597, %v601
    %v606 = vand.u32 2147483647, %v581
    %vm607 = vcmp.eq.f32.partialorder %v606, 8.507059e+37
    %v608 = vand.u32 %v581, 2147483648
    %v609 = vor.u32 1.1754944e-38, %v608
    %v610 = vsel %vm607, %v609, %v605
    %v611 = vmul.f32 %v569, %v610
    %v612 = vsub.f32 %v556, %v596
    %v613 = vsub.f32 %v557, %v611
    %v614 = vmax.f32 %v612, 0.0
    %v615 = vmax.f32 %v613, 0.0
    %v616 = vmul.f32 %v558, %v558
    %v617 = vmul.f32 %v559, %v559
    %v618 = vperm.slane %v548, 0
    %v619 = vperm.slane %v549, 0
    %v622 = vrcp.pop %v618
    %v623 = vmul.f32 %v618, %v622
    %v624 = vsub.f32 1.0, %v623
    %v625 = vmul.f32 %v622, %v624
    %v626 = vadd.f32 %v622, %v625
    %vm627 = vweird.f32 %v618
    %vm628 = vweird.f32 %v622
    %vm629 = vmor %vm627, %vm628
    %v630 = vsel %vm629, %v622, %v626
    %v631 = vand.u32 2147483647, %v618
    %vm632 = vcmp.eq.f32.partialorder %v631, 8.507059e+37
    %v633 = vand.u32 %v618, 2147483648
    %v634 = vor.u32 1.1754944e-38, %v633
    %v635 = vsel %vm632, %v634, %v630
    %v636 = vmul.f32 %v616, %v635
    %v637 = vrcp.pop %v619
    %v638 = vmul.f32 %v619, %v637
    %v639 = vsub.f32 1.0, %v638
    %v640 = vmul.f32 %v637, %v639
    %v641 = vadd.f32 %v637, %v640
    %vm642 = vweird.f32 %v619
    %vm643 = vweird.f32 %v637
    %vm644 = vmor %vm642, %vm643
    %v645 = vsel %vm644, %v637, %v641
    %v646 = vand.u32 2147483647, %v619
    %vm647 = vcmp.eq.f32.partialorder %v646, 8.507059e+37
    %v648 = vand.u32 %v619, 2147483648
    %v649 = vor.u32 1.1754944e-38, %v648
    %v650 = vsel %vm647, %v649, %v645
    %v651 = vmul.f32 %v617, %v650
    %v652 = vsub.f32 %v560, %v636
    %v653 = vsub.f32 %v561, %v651
    %v654 = vmax.f32 %v652, 0.0
    %v655 = vmax.f32 %v653, 0.0
    %657 = vset.pattern.permute.xlu0 0
    %658 = vperm.xlu0 %657, %v558
    %v659 = vpop.permute.xlu0 %658
    %662 = vset.pattern.permute.xlu0 0
    %663 = vperm.xlu0 %662, %v559
    %v664 = vpop.permute.xlu0 %663
    %v668 = vperm.slane %v552, 0
    %v669 = vperm.slane %v553, 0
    %v672 = vmul.f32 %v659, %v668
    %v673 = vmul.f32 %v664, %v669
    %674 = vset.pattern.permute.xlu0 0
    %675 = vperm.xlu0 %674, %v618
    %v676 = vpop.permute.xlu0 %675
    %678 = vset.pattern.permute.xlu0 0
    %679 = vperm.xlu0 %678, %v619
    %v680 = vpop.permute.xlu0 %679
    %v682 = vrcp.pop %v676
    %v683 = vmul.f32 %v676, %v682
    %v684 = vsub.f32 1.0, %v683
    %v685 = vmul.f32 %v682, %v684
    %v686 = vadd.f32 %v682, %v685
    %vm687 = vweird.f32 %v676
    %vm688 = vweird.f32 %v682
    %vm689 = vmor %vm687, %vm688
    %v690 = vsel %vm689, %v682, %v686
    %v691 = vand.u32 2147483647, %v676
    %vm692 = vcmp.eq.f32.partialorder %v691, 8.507059e+37
    %v693 = vand.u32 %v676, 2147483648
    %v694 = vor.u32 1.1754944e-38, %v693
    %v695 = vsel %vm692, %v694, %v690
    %v696 = vmul.f32 %v672, %v695
    %v697 = vrcp.pop %v680
    %v698 = vmul.f32 %v680, %v697
    %v699 = vsub.f32 1.0, %v698
    %v700 = vmul.f32 %v697, %v699
    %v701 = vadd.f32 %v697, %v700
    %vm702 = vweird.f32 %v680
    %vm703 = vweird.f32 %v697
    %vm704 = vmor %vm702, %vm703
    %v705 = vsel %vm704, %v697, %v701
    %v706 = vand.u32 2147483647, %v680
    %vm707 = vcmp.eq.f32.partialorder %v706, 8.507059e+37
    %v708 = vand.u32 %v680, 2147483648
    %v709 = vor.u32 1.1754944e-38, %v708
    %v710 = vsel %vm707, %v709, %v705
    %v711 = vmul.f32 %v673, %v710
    %v712 = vsub.f32 %v550, %v696
    %v713 = vsub.f32 %v551, %v711
    %v714 = vadd.f32 %v614, 1e-16
    %v715 = vadd.f32 %v615, 1e-16
    %v716 = vmul.f32 %v712, %v712
    %v717 = vmul.f32 %v713, %v713
    %v720 = vperm.slane %v614, 0
    %v721 = vperm.slane %v615, 0
    %v724 = vmul.f32 %v716, %v720
    %v725 = vmul.f32 %v717, %v721
    %v726 = vmul.f32 %v714, %v714
    %v727 = vmul.f32 %v715, %v715
    %v730 = vperm.slane %v726, 0
    %v731 = vperm.slane %v727, 0
    %v734 = vrcp.pop %v730
    %v735 = vmul.f32 %v730, %v734
    %v736 = vsub.f32 1.0, %v735
    %v737 = vmul.f32 %v734, %v736
    %v738 = vadd.f32 %v734, %v737
    %vm739 = vweird.f32 %v730
    %vm740 = vweird.f32 %v734
    %vm741 = vmor %vm739, %vm740
    %v742 = vsel %vm741, %v734, %v738
    %v743 = vand.u32 2147483647, %v730
    %vm744 = vcmp.eq.f32.partialorder %v743, 8.507059e+37
    %v745 = vand.u32 %v730, 2147483648
    %v746 = vor.u32 1.1754944e-38, %v745
    %v747 = vsel %vm744, %v746, %v742
    %v748 = vmul.f32 %v724, %v747
    %v749 = vrcp.pop %v731
    %v750 = vmul.f32 %v731, %v749
    %v751 = vsub.f32 1.0, %v750
    %v752 = vmul.f32 %v749, %v751
    %v753 = vadd.f32 %v749, %v752
    %vm754 = vweird.f32 %v731
    %vm755 = vweird.f32 %v749
    %vm756 = vmor %vm754, %vm755
    %v757 = vsel %vm756, %v749, %v753
    %v758 = vand.u32 2147483647, %v731
    %vm759 = vcmp.eq.f32.partialorder %v758, 8.507059e+37
    %v760 = vand.u32 %v731, 2147483648
    %v761 = vor.u32 1.1754944e-38, %v760
    %v762 = vsel %vm759, %v761, %v757
    %v763 = vmul.f32 %v725, %v762
    %v764 = vmul.f32 %v716, 2.0
    %v765 = vmul.f32 %v717, 2.0
    %v768 = vperm.slane %v714, 0
    %v769 = vperm.slane %v715, 0
    %v772 = vrcp.pop %v768
    %v773 = vmul.f32 %v768, %v772
    %v774 = vsub.f32 1.0, %v773
    %v775 = vmul.f32 %v772, %v774
    %v776 = vadd.f32 %v772, %v775
    %vm777 = vweird.f32 %v768
    %vm778 = vweird.f32 %v772
    %vm779 = vmor %vm777, %vm778
    %v780 = vsel %vm779, %v772, %v776
    %v781 = vand.u32 2147483647, %v768
    %vm782 = vcmp.eq.f32.partialorder %v781, 8.507059e+37
    %v783 = vand.u32 %v768, 2147483648
    %v784 = vor.u32 1.1754944e-38, %v783
    %v785 = vsel %vm782, %v784, %v780
    %v786 = vmul.f32 %v764, %v785
    %v787 = vrcp.pop %v769
    %v788 = vmul.f32 %v769, %v787
    %v789 = vsub.f32 1.0, %v788
    %v790 = vmul.f32 %v787, %v789
    %v791 = vadd.f32 %v787, %v790
    %vm792 = vweird.f32 %v769
    %vm793 = vweird.f32 %v787
    %vm794 = vmor %vm792, %vm793
    %v795 = vsel %vm794, %v787, %v791
    %v796 = vand.u32 2147483647, %v769
    %vm797 = vcmp.eq.f32.partialorder %v796, 8.507059e+37
    %v798 = vand.u32 %v769, 2147483648
    %v799 = vor.u32 1.1754944e-38, %v798
    %v800 = vsel %vm797, %v799, %v795
    %v801 = vmul.f32 %v765, %v800
    %803 = vset.pattern.permute.xlu0 0
    %804 = vperm.xlu0 %803, %v654
    %v805 = vpop.permute.xlu0 %804
    %808 = vset.pattern.permute.xlu0 0
    %809 = vperm.xlu0 %808, %v655
    %v810 = vpop.permute.xlu0 %809
    %v812 = vsub.f32 %v805, %v786
    %v813 = vsub.f32 %v810, %v801
    %v814 = vadd.f32 %v812, %v748
    %v815 = vadd.f32 %v813, %v763
    %v816 = vmax.f32 %v814, 0.0
    %v817 = vmax.f32 %v815, 0.0
    %v818 = vadd.f32 %v816, 1e-16
    %v819 = vadd.f32 %v817, 1e-16
    %v820 = vrcp.pop %v818
    %v821 = vmul.f32 %v818, %v820
    %v822 = vsub.f32 1.0, %v821
    %v823 = vmul.f32 %v820, %v822
    %v824 = vadd.f32 %v820, %v823
    %vm825 = vweird.f32 %v818
    %vm826 = vweird.f32 %v820
    %vm827 = vmor %vm825, %vm826
    %v828 = vsel %vm827, %v820, %v824
    %v829 = vand.u32 2147483647, %v818
    %vm830 = vcmp.eq.f32.partialorder %v829, 8.507059e+37
    %v831 = vand.u32 %v818, 2147483648
    %v832 = vor.u32 1.1754944e-38, %v831
    %v833 = vsel %vm830, %v832, %v828
    %v834 = vmul.f32 %v748, %v833
    %v835 = vrcp.pop %v819
    %v836 = vmul.f32 %v819, %v835
    %v837 = vsub.f32 1.0, %v836
    %v838 = vmul.f32 %v835, %v837
    %v839 = vadd.f32 %v835, %v838
    %vm840 = vweird.f32 %v819
    %vm841 = vweird.f32 %v835
    %vm842 = vmor %vm840, %vm841
    %v843 = vsel %vm842, %v835, %v839
    %v844 = vand.u32 2147483647, %v819
    %vm845 = vcmp.eq.f32.partialorder %v844, 8.507059e+37
    %v846 = vand.u32 %v819, 2147483648
    %v847 = vor.u32 1.1754944e-38, %v846
    %v848 = vsel %vm845, %v847, %v843
    %v849 = vmul.f32 %v763, %v848
    %v850 = vadd.f32 %v834, 1e-16
    %v851 = vadd.f32 %v849, 1e-16
    %v852 = vlog2.pop %v850
    %v853 = vmul.f32 %v852, 0.6931472
    %v854 = vlog2.pop %v851
    %v855 = vmul.f32 %v854, 0.6931472
    %v856 = vmul.f32 %v853, 0.4342945
    %v857 = vmul.f32 %v855, 0.4342945
    %v858 = vmul.f32 %v856, 10.0
    %v859 = vmul.f32 %v857, 10.0
    %860 = vst.msk [vmem:[%s3] sm:$0x7] %vm247, %v858
    %861 = vst.msk [vmem:[%s3 + $0x4] sm:$0x7] %vm247, %v859
  $region21: #{tpu_custom_call.1} parent=0 // pred_fallthru
    _
  // Predicated region
  $region22: #{tpu_custom_call.1} parent=0 // pred_check
    _
  $region23: #{tpu_custom_call.1} parent=0 // pred_check_branch
    %863 = sbr.rel (0) target = $region25
  $region24: #{tpu_custom_call.1} parent=0 // pred_region
    _
  $region25: #{tpu_custom_call.1} parent=0 // pred_fallthru
    _
  // Predicated region
  $region26: #{tpu_custom_call.1} parent=0 // pred_check
    _
  $region27: #{tpu_custom_call.1} parent=0 // pred_check_branch
    %865 = sbr.rel (0) target = $region29
  $region28: #{tpu_custom_call.1} parent=0 // pred_region
    _
  $region29: #{tpu_custom_call.1} parent=0 // pred_fallthru
    _

</llo_original>
